<compile_context>
chip_gen: v7x
topology: tpu7x:2x2x1
jax: 0.10.0
libtpu: 0.0.40
codegen_flags: <defaults>
</compile_context>

<pallas_src>
import jax
import jax.numpy as jnp
from jax import lax
from jax.experimental import pallas as pl
from jax.experimental.pallas import tpu as pltpu


ACT_DTYPE = jnp.bfloat16   # MXU compute dtype (f32 accumulation on the MXU)
OUT_DTYPE = jnp.bfloat16   # default output dtype (halves dominant HBM writes)


# ---------------------------------------------------------------------------
# Kernels
# ---------------------------------------------------------------------------
def _proj_in_kernel(qry_ref, key_ref, val_ref, wq_ref, wk_ref, wv_ref,
                    q_ref, k_ref, v_ref):
    # qry_ref: (Bb, Cq, HW) NCHW (HW on the lane dim); key_ref: (Bb, S, Dk);
    # val_ref: (Bb, Sv, Dv).  Weights arrive already bf16 (pre-cast at init);
    # activations are cast to bf16 here on the VPU (no wrapper convert pass).
    bb = qry_ref.shape[0]
    wq = wq_ref[...]
    wk = wk_ref[...]
    wv = wv_ref[...]
    for b in range(bb):                        # static -> fully unrolled
        x = qry_ref[b].astype(wq.dtype)        # (Cq, HW)
        # 1x1 conv == channel matmul: q[hw, e] = sum_c x[c, hw] * wq[c, e]
        q = lax.dot_general(x, wq, (((0,), (0,)), ((), ())),
                            preferred_element_type=jnp.float32)   # (HW, E)
        q_ref[b] = q.astype(q_ref.dtype)
        k_ref[b] = jnp.dot(key_ref[b].astype(wk.dtype), wk,
                           preferred_element_type=jnp.float32).astype(k_ref.dtype)
        v_ref[b] = jnp.dot(val_ref[b].astype(wv.dtype), wv,
                           preferred_element_type=jnp.float32).astype(v_ref.dtype)


def _proj_out_kernel(q_ref, w_ref, o_ref):
    # q_ref: (Bb, HW, E); w_ref: (E, Cq) bf16.
    # out[c, hw] = sum_e w[e, c] * q[hw, e]  -> (Cq, HW): already NCHW-flat
    # with HW on the lane dim (lane-dense stores, no trailing transpose).
    bb = q_ref.shape[0]
    w = w_ref[...]
    for b in range(bb):
        out = lax.dot_general(w, q_ref[b].astype(w.dtype),
                              (((0,), (1,)), ((), ())),
                              preferred_element_type=jnp.float32)  # (Cq, HW)
        o_ref[b] = out.astype(o_ref.dtype)


# ---------------------------------------------------------------------------
# Helpers / pallas_call wrappers
# ---------------------------------------------------------------------------
def _batch_block(B, per_batch_bytes, vmem_budget_bytes=8 << 20):
    """Pick the batch block size.

    Aim for exactly 2 parallel grid steps when B is even (>=2 steps keeps both
    v7x TensorCores busy; few steps keeps fixed per-step overhead low on the
    single-TC v5e/v6e), capped so double-buffered blocks stay well inside the
    scoped-VMEM defaults of every generation.
    """
    bb = B // 2 if (B >= 2 and B % 2 == 0) else 1
    max_bb = max(1, int(vmem_budget_bytes // max(int(per_batch_bytes), 1)))
    bb = max(1, min(bb, max_bb))
    while B % bb:
        bb -= 1
    return bb


def _proj_in_pallas(qry3, key, val, w_q, w_k, w_v, *, out_dtype=OUT_DTYPE):
    """qry3: (B, Cq, HW) NCHW-flat; key: (B, S, Dk); val: (B, Sv, Dv).
    Weights are the pre-cast bf16 copies, stored (Cin, Cout).
    Returns q: (B, HW, E), k: (B, S, E), v: (B, Sv, E) in `out_dtype`."""
    B, Cq, HW = qry3.shape
    _, S, Dk = key.shape
    _, Sv, Dv = val.shape
    E = w_q.shape[1]

    out_isz = jnp.dtype(out_dtype).itemsize
    in_bytes = (qry3.dtype.itemsize * Cq * HW + key.dtype.itemsize * S * Dk
                + val.dtype.itemsize * Sv * Dv)
    out_bytes = out_isz * (HW + S + Sv) * E
    bb = _batch_block(B, 2 * (in_bytes + out_bytes))   # x2 for double-buffer
    grid = (B // bb,)

    w_bytes = (w_q.dtype.itemsize * Cq * E + w_k.dtype.itemsize * Dk * E
               + w_v.dtype.itemsize * Dv * E)
    flops = 2 * B * (HW * Cq * E + S * Dk * E + Sv * Dv * E)
    bytes_accessed = B * (in_bytes + out_bytes) + w_bytes

    return pl.pallas_call(
        _proj_in_kernel,
        out_shape=(
            jax.ShapeDtypeStruct((B, HW, E), out_dtype),
            jax.ShapeDtypeStruct((B, S, E), out_dtype),
            jax.ShapeDtypeStruct((B, Sv, E), out_dtype),
        ),
        grid=grid,
        in_specs=[
            pl.BlockSpec((bb, Cq, HW), lambda g: (g, 0, 0)),
            pl.BlockSpec((bb, S, Dk), lambda g: (g, 0, 0)),
            pl.BlockSpec((bb, Sv, Dv), lambda g: (g, 0, 0)),
            pl.BlockSpec((Cq, E), lambda g: (0, 0)),    # weights stay resident
            pl.BlockSpec((Dk, E), lambda g: (0, 0)),
            pl.BlockSpec((Dv, E), lambda g: (0, 0)),
        ],
        out_specs=(
            pl.BlockSpec((bb, HW, E), lambda g: (g, 0, 0)),
            pl.BlockSpec((bb, S, E), lambda g: (g, 0, 0)),
            pl.BlockSpec((bb, Sv, E), lambda g: (g, 0, 0)),
        ),
        compiler_params=pltpu.CompilerParams(
            dimension_semantics=("parallel",)),
        cost_estimate=pl.CostEstimate(
            flops=int(flops), transcendentals=0,
            bytes_accessed=int(bytes_accessed)),
    )(qry3, key, val, w_q, w_k, w_v)


def _proj_out_pallas(q, w_fq, *, out_dtype=OUT_DTYPE):
    """q: (B, HW, E); w_fq: (E, Cq) bf16. Returns (B, Cq, HW) (NCHW-flat)."""
    B, HW, E = q.shape
    Cq = w_fq.shape[1]

    out_isz = jnp.dtype(out_dtype).itemsize
    in_bytes = q.dtype.itemsize * HW * E
    out_bytes = out_isz * Cq * HW
    bb = _batch_block(B, 2 * (in_bytes + out_bytes))
    grid = (B // bb,)

    flops = 2 * B * HW * E * Cq
    bytes_accessed = B * (in_bytes + out_bytes) + w_fq.dtype.itemsize * E * Cq

    return pl.pallas_call(
        _proj_out_kernel,
        out_shape=jax.ShapeDtypeStruct((B, Cq, HW), out_dtype),
        grid=grid,
        in_specs=[
            pl.BlockSpec((bb, HW, E), lambda g: (g, 0, 0)),
            pl.BlockSpec((E, Cq), lambda g: (0, 0)),
        ],
        out_specs=pl.BlockSpec((bb, Cq, HW), lambda g: (g, 0, 0)),
        compiler_params=pltpu.CompilerParams(
            dimension_semantics=("parallel",)),
        cost_estimate=pl.CostEstimate(
            flops=int(flops), transcendentals=0,
            bytes_accessed=int(bytes_accessed)),
    )(q, w_fq)


# ---------------------------------------------------------------------------
# Module wrapper (mirrors ConvLinearAdapter forward semantics)
# ---------------------------------------------------------------------------
class ConvLinearAdapterPallas:
    """JAX/Pallas port of ConvLinearAdapter (all projections bias-free)."""

    def __init__(self, qry_dim, emb_dim, key_dim=None, val_dim=None, *,
                 rng_key, out_dtype=OUT_DTYPE):
        key_dim = qry_dim if key_dim is None else key_dim
        val_dim = key_dim if val_dim is None else val_dim
        self.qry_dim, self.emb_dim = qry_dim, emb_dim
        self.key_dim, self.val_dim = key_dim, val_dim
        self.out_dtype = out_dtype

        k1, k2, k3, k4 = jax.random.split(rng_key, 4)
        # PyTorch weight shapes:
        #   to_q  : Conv2d(qry_dim, emb_dim, 1) -> (emb_dim, qry_dim, 1, 1)
        #   to_k  : Linear(key_dim, emb_dim)    -> (emb_dim, key_dim)
        #   to_v  : Linear(val_dim, emb_dim)    -> (emb_dim, val_dim)
        #   from_q: Conv2d(emb_dim, qry_dim, 1) -> (qry_dim, emb_dim, 1, 1)
        # Stored here transposed for right-multiplication: (Cin, Cout) f32 masters.
        self.w_q = 0.02 * jax.random.normal(k1, (qry_dim, emb_dim), jnp.float32)
        self.w_k = 0.02 * jax.random.normal(k2, (key_dim, emb_dim), jnp.float32)
        self.w_v = 0.02 * jax.random.normal(k3, (val_dim, emb_dim), jnp.float32)
        self.w_fq = 0.02 * jax.random.normal(k4, (emb_dim, qry_dim), jnp.float32)

        # bf16 compute copies, cast ONCE here (not per forward call).
        self.w_q_c = self.w_q.astype(ACT_DTYPE)
        self.w_k_c = self.w_k.astype(ACT_DTYPE)
        self.w_v_c = self.w_v.astype(ACT_DTYPE)
        self.w_fq_c = self.w_fq.astype(ACT_DTYPE)

        # NOTE: like the PyTorch module, h/w are Python-side state set by
        # _proj_in; don't jit across the _in/_out boundary with varying shapes.
        self.h = None
        self.w = None

    def __call__(self, qry, key=None, val=None):
        if key is not None and val is not None:
            return self._proj_in(qry, key, val)
        return self._proj_out(qry)

    def _proj_in(self, qry, key, val):
        # qry: (B, qry_dim, H, W)  [NCHW, like PyTorch]
        B, Cq, H, W = qry.shape
        self.h, self.w = H, W
        # Free reshape (contiguous trailing dims) -- no HBM transpose pass.
        qry3 = qry.reshape(B, Cq, H * W)
        q, k, v = _proj_in_pallas(qry3, key, val,
                                  self.w_q_c, self.w_k_c, self.w_v_c,
                                  out_dtype=self.out_dtype)
        return q, k, v

    def _proj_out(self, qry):
        if self.h is None:
            raise ValueError("Cannot call adapt._out before the _in method")
        # qry: (B, H*W, emb_dim); kernel writes (B, qry_dim, H*W) directly
        # (already NCHW-flat, lane-dense); reshape to (B, C, H, W) is free.
        B, HW, _ = qry.shape
        out = _proj_out_pallas(qry, self.w_fq_c, out_dtype=self.out_dtype)
        return out.reshape(B, self.qry_dim, self.h, self.w)


# ---------------------------------------------------------------------------
# Smoke test / correctness check
# ---------------------------------------------------------------------------
if __name__ == "__main__":
    B, qry_dim, emb_dim = 2, 4, 32
    H = W = 16
    S = 8  # key/val sequence length

    root = jax.random.PRNGKey(0)
    k_params, k_q, k_k, k_v = jax.random.split(root, 4)

    adapter = ConvLinearAdapterPallas(qry_dim, emb_dim, rng_key=k_params)

    qry = jax.random.normal(k_q, (B, qry_dim, H, W), jnp.float32)   # NCHW
    key = jax.random.normal(k_k, (B, S, qry_dim), jnp.float32)
    val = jax.random.normal(k_v, (B, S, qry_dim), jnp.float32)

    # _proj_in (single fused pallas_call for q/k/v)
    q, k, v = adapter(qry, key, val)
    q, k, v = jax.block_until_ready((q, k, v))

    # _proj_out (feed the attention-shaped tensor back through)
    out = adapter(q)
    out = jax.block_until_ready(out)

    assert q.shape == (B, H * W, emb_dim) and q.dtype == adapter.out_dtype
    assert k.shape == (B, S, emb_dim) and v.shape == (B, S, emb_dim)
    assert out.shape == (B, qry_dim, H, W)

    # Pure-JAX f32 references (f32 master weights).
    q_ref = jnp.transpose(qry, (0, 2, 3, 1)).reshape(B, H * W, qry_dim) @ adapter.w_q
    k_ref = key @ adapter.w_k
    v_ref = val @ adapter.w_v
    out_ref = jnp.transpose(
        q.astype(jnp.float32).reshape(B, H, W, emb_dim) @ adapter.w_fq,
        (0, 3, 1, 2))

    # bf16 activations/weights/outputs, f32 accumulation -> loosened tolerance.
    tol = dict(atol=2e-2, rtol=2e-2)
    qf, kf, vf, of = (x.astype(jnp.float32) for x in (q, k, v, out))
    assert jnp.allclose(qf, q_ref, **tol), float(jnp.max(jnp.abs(qf - q_ref)))
    assert jnp.allclose(kf, k_ref, **tol), float(jnp.max(jnp.abs(kf - k_ref)))
    assert jnp.allclose(vf, v_ref, **tol), float(jnp.max(jnp.abs(vf - v_ref)))
    assert jnp.allclose(of, out_ref, **tol), float(jnp.max(jnp.abs(of - out_ref)))

    print("KERNEL_OK")
</pallas_src>

<mosaic_0001>
module attributes {stable_mosaic.version = 11 : i64} {
  func.func @_proj_in_kernel(%arg0: i32, %arg1: memref<1x4x256xf32, #tpu.memory_space<vmem>>, %arg2: memref<1x8x4xf32, #tpu.memory_space<vmem>>, %arg3: memref<1x8x4xf32, #tpu.memory_space<vmem>>, %arg4: memref<4x32xbf16, #tpu.memory_space<vmem>>, %arg5: memref<4x32xbf16, #tpu.memory_space<vmem>>, %arg6: memref<4x32xbf16, #tpu.memory_space<vmem>>, %arg7: memref<1x256x32xbf16, #tpu.memory_space<vmem>>, %arg8: memref<1x8x32xbf16, #tpu.memory_space<vmem>>, %arg9: memref<1x8x32xbf16, #tpu.memory_space<vmem>>) attributes {dimension_semantics = [#tpu.dimension_semantics<parallel>], iteration_bounds = array<i64: 2>, scalar_prefetch = 0 : i64, scratch_operands = 0 : i64, tpu.core_type = #tpu.core_type<tc>, window_params = [{transform_indices = @transform_0, window_bounds = array<i64: 1, 4, 256>}, {transform_indices = @transform_1, window_bounds = array<i64: 1, 8, 4>}, {transform_indices = @transform_2, window_bounds = array<i64: 1, 8, 4>}, {pipeline_mode = #tpu.pipeline_mode<synchronous>, transform_indices = @transform_3, window_bounds = array<i64: 4, 32>}, {pipeline_mode = #tpu.pipeline_mode<synchronous>, transform_indices = @transform_4, window_bounds = array<i64: 4, 32>}, {pipeline_mode = #tpu.pipeline_mode<synchronous>, transform_indices = @transform_5, window_bounds = array<i64: 4, 32>}, {transform_indices = @transform_6, window_bounds = array<i64: 1, 256, 32>}, {transform_indices = @transform_7, window_bounds = array<i64: 1, 8, 32>}, {transform_indices = @transform_8, window_bounds = array<i64: 1, 8, 32>}]} {
    %c0 = arith.constant 0 : index
    %c0_0 = arith.constant 0 : index
    %0 = vector.load %arg4[%c0, %c0_0] : memref<4x32xbf16, #tpu.memory_space<vmem>>, vector<4x32xbf16>
    %c0_1 = arith.constant 0 : index
    %c0_2 = arith.constant 0 : index
    %1 = vector.load %arg5[%c0_1, %c0_2] : memref<4x32xbf16, #tpu.memory_space<vmem>>, vector<4x32xbf16>
    %c0_3 = arith.constant 0 : index
    %c0_4 = arith.constant 0 : index
    %2 = vector.load %arg6[%c0_3, %c0_4] : memref<4x32xbf16, #tpu.memory_space<vmem>>, vector<4x32xbf16>
    %c0_5 = arith.constant 0 : index
    %c0_6 = arith.constant 0 : index
    %c0_7 = arith.constant 0 : index
    %3 = vector.load %arg1[%c0_5, %c0_6, %c0_7] : memref<1x4x256xf32, #tpu.memory_space<vmem>>, vector<1x4x256xf32>
    %4 = vector.shape_cast %3 : vector<1x4x256xf32> to vector<4x256xf32>
    %5 = arith.truncf %4 : vector<4x256xf32> to vector<4x256xbf16>
    %cst = arith.constant dense<0.000000e+00> : vector<256x32xf32>
    %6 = tpu.matmul %5, %0, %cst {dimension_numbers = #tpu.dot_dimension_numbers<[0], [0], [1], [1], [0, 1, 1, 1], [], []>} : vector<4x256xbf16>, vector<4x32xbf16>, vector<256x32xf32> -> vector<256x32xf32>
    %7 = arith.truncf %6 : vector<256x32xf32> to vector<256x32xbf16>
    %c0_8 = arith.constant 0 : index
    %c0_9 = arith.constant 0 : index
    %c0_10 = arith.constant 0 : index
    %8 = vector.load %arg7[%c0_8, %c0_9, %c0_10] : memref<1x256x32xbf16, #tpu.memory_space<vmem>>, vector<1x256x32xbf16>
    %9 = vector.shape_cast %8 : vector<1x256x32xbf16> to vector<256x32xbf16>
    %10 = vector.shape_cast %7 : vector<256x32xbf16> to vector<1x256x32xbf16>
    tpu.vector_store %arg7[%c0_8, %c0_9, %c0_10], %10 {strides = array<i32>} : memref<1x256x32xbf16, #tpu.memory_space<vmem>>, vector<1x256x32xbf16>,
    %c0_11 = arith.constant 0 : index
    %c0_12 = arith.constant 0 : index
    %c0_13 = arith.constant 0 : index
    %11 = vector.load %arg2[%c0_11, %c0_12, %c0_13] : memref<1x8x4xf32, #tpu.memory_space<vmem>>, vector<1x8x4xf32>
    %12 = vector.shape_cast %11 : vector<1x8x4xf32> to vector<8x4xf32>
    %13 = arith.truncf %12 : vector<8x4xf32> to vector<8x4xbf16>
    %cst_14 = arith.constant dense<0.000000e+00> : vector<8x32xf32>
    %14 = tpu.matmul %13, %1, %cst_14 {dimension_numbers = #tpu.dot_dimension_numbers<[1], [0], [0], [1], [0, 0, 1, 1], [], []>} : vector<8x4xbf16>, vector<4x32xbf16>, vector<8x32xf32> -> vector<8x32xf32>
    %15 = arith.truncf %14 : vector<8x32xf32> to vector<8x32xbf16>
    %c0_15 = arith.constant 0 : index
    %c0_16 = arith.constant 0 : index
    %c0_17 = arith.constant 0 : index
    %16 = vector.load %arg8[%c0_15, %c0_16, %c0_17] : memref<1x8x32xbf16, #tpu.memory_space<vmem>>, vector<1x8x32xbf16>
    %17 = vector.shape_cast %16 : vector<1x8x32xbf16> to vector<8x32xbf16>
    %18 = vector.shape_cast %15 : vector<8x32xbf16> to vector<1x8x32xbf16>
    tpu.vector_store %arg8[%c0_15, %c0_16, %c0_17], %18 {strides = array<i32>} : memref<1x8x32xbf16, #tpu.memory_space<vmem>>, vector<1x8x32xbf16>,
    %c0_18 = arith.constant 0 : index
    %c0_19 = arith.constant 0 : index
    %c0_20 = arith.constant 0 : index
    %19 = vector.load %arg3[%c0_18, %c0_19, %c0_20] : memref<1x8x4xf32, #tpu.memory_space<vmem>>, vector<1x8x4xf32>
    %20 = vector.shape_cast %19 : vector<1x8x4xf32> to vector<8x4xf32>
    %21 = arith.truncf %20 : vector<8x4xf32> to vector<8x4xbf16>
    %cst_21 = arith.constant dense<0.000000e+00> : vector<8x32xf32>
    %22 = tpu.matmul %21, %2, %cst_21 {dimension_numbers = #tpu.dot_dimension_numbers<[1], [0], [0], [1], [0, 0, 1, 1], [], []>} : vector<8x4xbf16>, vector<4x32xbf16>, vector<8x32xf32> -> vector<8x32xf32>
    %23 = arith.truncf %22 : vector<8x32xf32> to vector<8x32xbf16>
    %c0_22 = arith.constant 0 : index
    %c0_23 = arith.constant 0 : index
    %c0_24 = arith.constant 0 : index
    %24 = vector.load %arg9[%c0_22, %c0_23, %c0_24] : memref<1x8x32xbf16, #tpu.memory_space<vmem>>, vector<1x8x32xbf16>
    %25 = vector.shape_cast %24 : vector<1x8x32xbf16> to vector<8x32xbf16>
    %26 = vector.shape_cast %23 : vector<8x32xbf16> to vector<1x8x32xbf16>
    tpu.vector_store %arg9[%c0_22, %c0_23, %c0_24], %26 {strides = array<i32>} : memref<1x8x32xbf16, #tpu.memory_space<vmem>>, vector<1x8x32xbf16>,
    return
  }
  func.func @transform_0(%arg0: i32) -> (i32, i32, i32) {
    %c0_i32 = arith.constant 0 : i32
    %c0_i32_0 = arith.constant 0 : i32
    %c0_i32_1 = arith.constant 0 : i32
    return %arg0, %c0_i32, %c0_i32_0 : i32, i32, i32
  }
  func.func @transform_1(%arg0: i32) -> (i32, i32, i32) {
    %c0_i32 = arith.constant 0 : i32
    %c0_i32_0 = arith.constant 0 : i32
    %c0_i32_1 = arith.constant 0 : i32
    return %arg0, %c0_i32, %c0_i32_0 : i32, i32, i32
  }
  func.func @transform_2(%arg0: i32) -> (i32, i32, i32) {
    %c0_i32 = arith.constant 0 : i32
    %c0_i32_0 = arith.constant 0 : i32
    %c0_i32_1 = arith.constant 0 : i32
    return %arg0, %c0_i32, %c0_i32_0 : i32, i32, i32
  }
  func.func @transform_3(%arg0: i32) -> (i32, i32) {
    %c0_i32 = arith.constant 0 : i32
    %c0_i32_0 = arith.constant 0 : i32
    %c0_i32_1 = arith.constant 0 : i32
    return %c0_i32, %c0_i32_0 : i32, i32
  }
  func.func @transform_4(%arg0: i32) -> (i32, i32) {
    %c0_i32 = arith.constant 0 : i32
    %c0_i32_0 = arith.constant 0 : i32
    %c0_i32_1 = arith.constant 0 : i32
    return %c0_i32, %c0_i32_0 : i32, i32
  }
  func.func @transform_5(%arg0: i32) -> (i32, i32) {
    %c0_i32 = arith.constant 0 : i32
    %c0_i32_0 = arith.constant 0 : i32
    %c0_i32_1 = arith.constant 0 : i32
    return %c0_i32, %c0_i32_0 : i32, i32
  }
  func.func @transform_6(%arg0: i32) -> (i32, i32, i32) {
    %c0_i32 = arith.constant 0 : i32
    %c0_i32_0 = arith.constant 0 : i32
    %c0_i32_1 = arith.constant 0 : i32
    return %arg0, %c0_i32, %c0_i32_0 : i32, i32, i32
  }
  func.func @transform_7(%arg0: i32) -> (i32, i32, i32) {
    %c0_i32 = arith.constant 0 : i32
    %c0_i32_0 = arith.constant 0 : i32
    %c0_i32_1 = arith.constant 0 : i32
    return %arg0, %c0_i32, %c0_i32_0 : i32, i32, i32
  }
  func.func @transform_8(%arg0: i32) -> (i32, i32, i32) {
    %c0_i32 = arith.constant 0 : i32
    %c0_i32_0 = arith.constant 0 : i32
    %c0_i32_1 = arith.constant 0 : i32
    return %arg0, %c0_i32, %c0_i32_0 : i32, i32, i32
  }
}

</mosaic_0001>

<llo_original>
// kernel: tpu_custom_call.1
$region0: #{tpu_custom_call.1}
  #allocation0 [shape = 'u32[]', space=smem, size = 0x4, offset = 0x4, fixed_abs, tag = 'smem constant byte address 0x4 - core index']
  #allocation1 [shape = 'u32[144,128]{1,0:T(1,128)}', space=vmem, size = 0x12000, scoped, tag = 'internal scratch']
  %s0 = inlined_call_operand.vmem [shape: f32[2,4,256], index: 0, kind: input, shape index: {}]
  %s1 = inlined_call_operand.vmem [shape: f32[2,8,4], index: 1, kind: input, shape index: {}]
  %s2 = inlined_call_operand.vmem [shape: f32[2,8,4], index: 2, kind: input, shape index: {}]
  %s3 = inlined_call_operand.vmem [shape: bf16[4,32], index: 3, kind: input, shape index: {}]
  %s4 = inlined_call_operand.vmem [shape: bf16[4,32], index: 4, kind: input, shape index: {}]
  %s5 = inlined_call_operand.vmem [shape: bf16[4,32], index: 5, kind: input, shape index: {}]
  %s6 = inlined_call_operand.vmem [shape: bf16[2,256,32], index: 6, kind: output, shape index: {0}]
  %s7 = inlined_call_operand.hbm [shape: bf16[2,8,32], index: 7, kind: output, shape index: {1}]
  %s8 = inlined_call_operand.hbm [shape: bf16[2,8,32], index: 8, kind: output, shape index: {2}]
  %9 = xla_tuple %s6, %s7, %s8
  %s10 = sld [smem:[#allocation0]]
  $region73: #{tpu_custom_call.1} parent=0
    _
  %s12 = ssub.s32 1, %s10
  %s13 = scalar_select 0, %s12, %s10
  $region1: #{tpu_custom_call.1} parent=0
    #allocation2 [shape = 'u8[4096]{0}', space=vmem, size = 0x1000, scoped, tag = 'output window, operand 1']
    #allocation3 [shape = 's32[2]{0}', space=sflag, size = 0x8, scoped, tag = 'scoped memory for tpu_custom_call.1']
    #allocation4 [shape = 'u8[4096]{0}', space=vmem, size = 0x1000, scoped, tag = 'output window, operand 2']
    #allocation5 [shape = 's32[2]{0}', space=sflag, size = 0x8, scoped, tag = 'scoped memory for tpu_custom_call.1']
    %14 = vsyncpa [#allocation3], 0
    %s15 = scalar_lea.sflag [#allocation3], 1
    %16 = vsyncpa %s15, 0
    %17 = vsyncpa [#allocation5], 0
    %s18 = scalar_lea.sflag [#allocation5], 1
    %19 = vsyncpa %s18, 0
    loop: start=0, step=1, limit=4
    $region2: #{tpu_custom_call.1} parent=1 // loop_pre_header
      _
    $region3: #{tpu_custom_call.1} parent=1 // loop_header
      %s21 = sphi 0, %s25
      %p22 = scmp.ge.s32.totalorder %s21, 4
      %s31 = sphi 0, %s33
      %s34 = sphi 0, %s31
      %s35 = sphi 0, %s34
      %s51 = sphi 0, %s35
      %s57 = sphi 0, %s59
      %s60 = sphi 0, %s57
      %s61 = sphi 0, %s60
      %s77 = sphi 0, %s61
      %s83 = sphi 0, %s85
      %s86 = sphi 0, %s83
      %s87 = sphi 0, %s86
      %s103 = sphi 0, %s87
      %s107 = sphi 0, %s107
      %s109 = sphi 0, %s107
      %s110 = sphi 0, %s109
      %s124 = sphi 0, %s110
      %s128 = sphi 0, %s128
      %s130 = sphi 0, %s128
      %s131 = sphi 0, %s130
      %s145 = sphi 0, %s131
      %s149 = sphi 0, %s149
      %s151 = sphi 0, %s149
      %s152 = sphi 0, %s151
      %s166 = sphi 0, %s152
      %s172 = sphi 0, %s174
      %s175 = sphi 0, %s172
      %s176 = sphi 0, %s175
      %s192 = sphi 0, %s176
      %s198 = sphi 0, %s200
      %s201 = sphi 0, %s198
      %s202 = sphi 0, %s201
      %s218 = sphi 0, %s202
      %s224 = sphi 0, %s226
      %s227 = sphi 0, %s224
      %s228 = sphi 0, %s227
      %s244 = sphi 0, %s228
    $region4: #{tpu_custom_call.1} parent=1 // loop_header_branch
      %24 = sbr.rel (%p22) target = $region8
    $region5: #{tpu_custom_call.1} parent=1 // loop_body
      %s26 = ssub.s32 %s21, 1
      %s27 = ssub.s32 %s21, 2
      %s28 = sadd.s32 %s21, 1
      %s29 = ssub.s32 %s21, %s28
      %p30 = scmp.eq.s32.totalorder %s29, 0
      %s32 = sadd.s32 %s31, 1
      %s33 = scalar_select %p30, %s31, %s32
      %p36 = pneg %p30
      %p37 = scmp.eq.s32.totalorder %s21, 1
      %p38 = por %p36, %p37
      %p39 = scmp.ne.s32.totalorder %s31, %s34
      %p40 = scmp.eq.s32.totalorder %s21, 0
      %p41 = por %p39, %p40
      %p42 = scmp.ne.s32.totalorder %s31, %s34
      %p43 = scmp.eq.s32.totalorder %s26, 1
      %p44 = por %p42, %p43
      %p45 = scmp.ne.s32.totalorder %s34, %s35
      %p46 = scmp.eq.s32.totalorder %s26, 0
      %p47 = por %p45, %p46
      %p48 = scmp.ne.s32.totalorder %s34, %s35
      %p49 = scmp.eq.s32.totalorder %s27, 1
      %p50 = por %p48, %p49
      %p52 = scmp.ne.s32.totalorder %s35, %s51
      %p53 = scmp.eq.s32.totalorder %s27, 0
      %p54 = por %p52, %p53
      %s55 = ssub.s32 %s21, %s28
      %p56 = scmp.eq.s32.totalorder %s55, 0
      %s58 = sadd.s32 %s57, 1
      %s59 = scalar_select %p56, %s57, %s58
      %p62 = pneg %p56
      %p63 = scmp.eq.s32.totalorder %s21, 1
      %p64 = por %p62, %p63
      %p65 = scmp.ne.s32.totalorder %s57, %s60
      %p66 = scmp.eq.s32.totalorder %s21, 0
      %p67 = por %p65, %p66
      %p68 = scmp.ne.s32.totalorder %s57, %s60
      %p69 = scmp.eq.s32.totalorder %s26, 1
      %p70 = por %p68, %p69
      %p71 = scmp.ne.s32.totalorder %s60, %s61
      %p72 = scmp.eq.s32.totalorder %s26, 0
      %p73 = por %p71, %p72
      %p74 = scmp.ne.s32.totalorder %s60, %s61
      %p75 = scmp.eq.s32.totalorder %s27, 1
      %p76 = por %p74, %p75
      %p78 = scmp.ne.s32.totalorder %s61, %s77
      %p79 = scmp.eq.s32.totalorder %s27, 0
      %p80 = por %p78, %p79
      %s81 = ssub.s32 %s21, %s28
      %p82 = scmp.eq.s32.totalorder %s81, 0
      %s84 = sadd.s32 %s83, 1
      %s85 = scalar_select %p82, %s83, %s84
      %p88 = pneg %p82
      %p89 = scmp.eq.s32.totalorder %s21, 1
      %p90 = por %p88, %p89
      %p91 = scmp.ne.s32.totalorder %s83, %s86
      %p92 = scmp.eq.s32.totalorder %s21, 0
      %p93 = por %p91, %p92
      %p94 = scmp.ne.s32.totalorder %s83, %s86
      %p95 = scmp.eq.s32.totalorder %s26, 1
      %p96 = por %p94, %p95
      %p97 = scmp.ne.s32.totalorder %s86, %s87
      %p98 = scmp.eq.s32.totalorder %s26, 0
      %p99 = por %p97, %p98
      %p100 = scmp.ne.s32.totalorder %s86, %s87
      %p101 = scmp.eq.s32.totalorder %s27, 1
      %p102 = por %p100, %p101
      %p104 = scmp.ne.s32.totalorder %s87, %s103
      %p105 = scmp.eq.s32.totalorder %s27, 0
      %p106 = por %p104, %p105
      %s108 = sadd.s32 %s107, 1
      %p111 = scmp.eq.s32.totalorder %s21, 1
      %p112 = scmp.ne.s32.totalorder %s107, %s109
      %p113 = scmp.eq.s32.totalorder %s21, 0
      %p114 = por %p112, %p113
      %p115 = scmp.ne.s32.totalorder %s107, %s109
      %p116 = scmp.eq.s32.totalorder %s26, 1
      %p117 = por %p115, %p116
      %p118 = scmp.ne.s32.totalorder %s109, %s110
      %p119 = scmp.eq.s32.totalorder %s26, 0
      %p120 = por %p118, %p119
      %p121 = scmp.ne.s32.totalorder %s109, %s110
      %p122 = scmp.eq.s32.totalorder %s27, 1
      %p123 = por %p121, %p122
      %p125 = scmp.ne.s32.totalorder %s110, %s124
      %p126 = scmp.eq.s32.totalorder %s27, 0
      %p127 = por %p125, %p126
      %s129 = sadd.s32 %s128, 1
      %p132 = scmp.eq.s32.totalorder %s21, 1
      %p133 = scmp.ne.s32.totalorder %s128, %s130
      %p134 = scmp.eq.s32.totalorder %s21, 0
      %p135 = por %p133, %p134
      %p136 = scmp.ne.s32.totalorder %s128, %s130
      %p137 = scmp.eq.s32.totalorder %s26, 1
      %p138 = por %p136, %p137
      %p139 = scmp.ne.s32.totalorder %s130, %s131
      %p140 = scmp.eq.s32.totalorder %s26, 0
      %p141 = por %p139, %p140
      %p142 = scmp.ne.s32.totalorder %s130, %s131
      %p143 = scmp.eq.s32.totalorder %s27, 1
      %p144 = por %p142, %p143
      %p146 = scmp.ne.s32.totalorder %s131, %s145
      %p147 = scmp.eq.s32.totalorder %s27, 0
      %p148 = por %p146, %p147
      %s150 = sadd.s32 %s149, 1
      %p153 = scmp.eq.s32.totalorder %s21, 1
      %p154 = scmp.ne.s32.totalorder %s149, %s151
      %p155 = scmp.eq.s32.totalorder %s21, 0
      %p156 = por %p154, %p155
      %p157 = scmp.ne.s32.totalorder %s149, %s151
      %p158 = scmp.eq.s32.totalorder %s26, 1
      %p159 = por %p157, %p158
      %p160 = scmp.ne.s32.totalorder %s151, %s152
      %p161 = scmp.eq.s32.totalorder %s26, 0
      %p162 = por %p160, %p161
      %p163 = scmp.ne.s32.totalorder %s151, %s152
      %p164 = scmp.eq.s32.totalorder %s27, 1
      %p165 = por %p163, %p164
      %p167 = scmp.ne.s32.totalorder %s152, %s166
      %p168 = scmp.eq.s32.totalorder %s27, 0
      %p169 = por %p167, %p168
      %s170 = ssub.s32 %s21, %s28
      %p171 = scmp.eq.s32.totalorder %s170, 0
      %s173 = sadd.s32 %s172, 1
      %s174 = scalar_select %p171, %s172, %s173
      %p177 = pneg %p171
      %p178 = scmp.eq.s32.totalorder %s21, 1
      %p179 = por %p177, %p178
      %p180 = scmp.ne.s32.totalorder %s172, %s175
      %p181 = scmp.eq.s32.totalorder %s21, 0
      %p182 = por %p180, %p181
      %p183 = scmp.ne.s32.totalorder %s172, %s175
      %p184 = scmp.eq.s32.totalorder %s26, 1
      %p185 = por %p183, %p184
      %p186 = scmp.ne.s32.totalorder %s175, %s176
      %p187 = scmp.eq.s32.totalorder %s26, 0
      %p188 = por %p186, %p187
      %p189 = scmp.ne.s32.totalorder %s175, %s176
      %p190 = scmp.eq.s32.totalorder %s27, 1
      %p191 = por %p189, %p190
      %p193 = scmp.ne.s32.totalorder %s176, %s192
      %p194 = scmp.eq.s32.totalorder %s27, 0
      %p195 = por %p193, %p194
      %s196 = ssub.s32 %s21, %s28
      %p197 = scmp.eq.s32.totalorder %s196, 0
      %s199 = sadd.s32 %s198, 1
      %s200 = scalar_select %p197, %s198, %s199
      %p203 = pneg %p197
      %p204 = scmp.eq.s32.totalorder %s21, 1
      %p205 = por %p203, %p204
      %p206 = scmp.ne.s32.totalorder %s198, %s201
      %p207 = scmp.eq.s32.totalorder %s21, 0
      %p208 = por %p206, %p207
      %p209 = scmp.ne.s32.totalorder %s198, %s201
      %p210 = scmp.eq.s32.totalorder %s26, 1
      %p211 = por %p209, %p210
      %p212 = scmp.ne.s32.totalorder %s201, %s202
      %p213 = scmp.eq.s32.totalorder %s26, 0
      %p214 = por %p212, %p213
      %p215 = scmp.ne.s32.totalorder %s201, %s202
      %p216 = scmp.eq.s32.totalorder %s27, 1
      %p217 = por %p215, %p216
      %p219 = scmp.ne.s32.totalorder %s202, %s218
      %p220 = scmp.eq.s32.totalorder %s27, 0
      %p221 = por %p219, %p220
      %s222 = ssub.s32 %s21, %s28
      %p223 = scmp.eq.s32.totalorder %s222, 0
      %s225 = sadd.s32 %s224, 1
      %s226 = scalar_select %p223, %s224, %s225
      %p229 = pneg %p223
      %p230 = scmp.eq.s32.totalorder %s21, 1
      %p231 = por %p229, %p230
      %p232 = scmp.ne.s32.totalorder %s224, %s227
      %p233 = scmp.eq.s32.totalorder %s21, 0
      %p234 = por %p232, %p233
      %p235 = scmp.ne.s32.totalorder %s224, %s227
      %p236 = scmp.eq.s32.totalorder %s26, 1
      %p237 = por %p235, %p236
      %p238 = scmp.ne.s32.totalorder %s227, %s228
      %p239 = scmp.eq.s32.totalorder %s26, 0
      %p240 = por %p238, %p239
      %p241 = scmp.ne.s32.totalorder %s227, %s228
      %p242 = scmp.eq.s32.totalorder %s27, 1
      %p243 = por %p241, %p242
      %p245 = scmp.ne.s32.totalorder %s228, %s244
      %p246 = scmp.eq.s32.totalorder %s27, 0
      %p247 = por %p245, %p246
      %p248 = scmp.le.s32.totalorder 1, %s21
      %p249 = scmp.lt.s32.totalorder %s21, 3
      %p250 = pnand %p248, %p249
      %p251 = pneg %p250
      // Predicated region
      $region9: #{tpu_custom_call.1} parent=5 // pred_check
        _
      $region10: #{tpu_custom_call.1} parent=5 // pred_check_branch
        %253 = sbr.rel (%p250) target = $region12
      $region11: #{tpu_custom_call.1} parent=5 // pred_region
        %s254 = ssub.s32 %s21, 1
        // Predicated region
        $region13: #{tpu_custom_call.1} parent=11 // pred_check
          %p255 = pneg %p120
        $region14: #{tpu_custom_call.1} parent=11 // pred_check_branch
          %257 = sbr.rel (%p255) target = $region16
        $region15: #{tpu_custom_call.1} parent=11 // pred_region
          _
        $region16: #{tpu_custom_call.1} parent=11 // pred_fallthru
          _
        // Predicated region
        $region17: #{tpu_custom_call.1} parent=11 // pred_check
          %p258 = pneg %p141
        $region18: #{tpu_custom_call.1} parent=11 // pred_check_branch
          %260 = sbr.rel (%p258) target = $region20
        $region19: #{tpu_custom_call.1} parent=11 // pred_region
          _
        $region20: #{tpu_custom_call.1} parent=11 // pred_fallthru
          _
        // Predicated region
        $region21: #{tpu_custom_call.1} parent=11 // pred_check
          %p261 = pneg %p162
        $region22: #{tpu_custom_call.1} parent=11 // pred_check_branch
          %263 = sbr.rel (%p261) target = $region24
        $region23: #{tpu_custom_call.1} parent=11 // pred_region
          _
        $region24: #{tpu_custom_call.1} parent=11 // pred_fallthru
          _
      $region12: #{tpu_custom_call.1} parent=5 // pred_fallthru
        _
      %p264 = scmp.lt.s32.totalorder %s21, 2
      // Predicated region
      $region25: #{tpu_custom_call.1} parent=5 // pred_check
        %p265 = pneg %p264
      $region26: #{tpu_custom_call.1} parent=5 // pred_check_branch
        %267 = sbr.rel (%p265) target = $region28
      $region27: #{tpu_custom_call.1} parent=5 // pred_region
        // Predicated region
        $region29: #{tpu_custom_call.1} parent=27 // pred_check
          %p268 = pneg %p41
        $region30: #{tpu_custom_call.1} parent=27 // pred_check_branch
          %270 = sbr.rel (%p268) target = $region32
        $region31: #{tpu_custom_call.1} parent=27 // pred_region
          %p271 = scmp.lt.s32.totalorder %s21, 1
          %s272 = scalar_select %p271, %s21, 1
          %s273 = smul.addr %s272, 2
          %s274 = smul.addr %s273, 4
          %s275 = scalar_lea.vmem %s0, %s274
        $region32: #{tpu_custom_call.1} parent=27 // pred_fallthru
          _
        // Predicated region
        $region33: #{tpu_custom_call.1} parent=27 // pred_check
          %p276 = pneg %p67
        $region34: #{tpu_custom_call.1} parent=27 // pred_check_branch
          %278 = sbr.rel (%p276) target = $region36
        $region35: #{tpu_custom_call.1} parent=27 // pred_region
          %p279 = scmp.lt.s32.totalorder %s21, 1
          %s280 = scalar_select %p279, %s21, 1
          %s281 = smul.addr %s280, 8
          %s282 = scalar_lea.vmem %s1, %s281
        $region36: #{tpu_custom_call.1} parent=27 // pred_fallthru
          _
        // Predicated region
        $region37: #{tpu_custom_call.1} parent=27 // pred_check
          %p283 = pneg %p93
        $region38: #{tpu_custom_call.1} parent=27 // pred_check_branch
          %285 = sbr.rel (%p283) target = $region40
        $region39: #{tpu_custom_call.1} parent=27 // pred_region
          %p286 = scmp.lt.s32.totalorder %s21, 1
          %s287 = scalar_select %p286, %s21, 1
          %s288 = smul.addr %s287, 8
          %s289 = scalar_lea.vmem %s2, %s288
        $region40: #{tpu_custom_call.1} parent=27 // pred_fallthru
          _
      $region28: #{tpu_custom_call.1} parent=5 // pred_fallthru
        _
      %p290 = scmp.le.s32.totalorder 1, %s21
      %p291 = scmp.lt.s32.totalorder %s21, 3
      %p292 = pnand %p290, %p291
      %p293 = pneg %p292
      // Predicated region
      $region41: #{tpu_custom_call.1} parent=5 // pred_check
        _
      $region42: #{tpu_custom_call.1} parent=5 // pred_check_branch
        %295 = sbr.rel (%p292) target = $region44
      $region43: #{tpu_custom_call.1} parent=5 // pred_region
        %s296 = ssub.s32 %s21, 1
        %p297 = scmp.lt.s32.totalorder %s26, 1
        %s298 = scalar_select %p297, %s26, 1
        %s299 = smul.addr %s298, 2
        %s300 = smul.addr %s299, 4
        %s301 = scalar_lea.vmem %s0, %s300
        %p302 = pneg %p47
        %p303 = pneg %p44
        %p304 = scmp.lt.s32.totalorder %s26, 1
        %s305 = scalar_select %p304, %s26, 1
        %s306 = smul.addr %s305, 8
        %s307 = scalar_lea.vmem %s1, %s306
        %p308 = pneg %p73
        %p309 = pneg %p70
        %p310 = scmp.lt.s32.totalorder %s26, 1
        %s311 = scalar_select %p310, %s26, 1
        %s312 = smul.addr %s311, 8
        %s313 = scalar_lea.vmem %s2, %s312
        %p314 = pneg %p99
        %p315 = pneg %p96
        %p316 = pneg %p120
        %p317 = pneg %p117
        %p318 = pneg %p141
        %p319 = pneg %p138
        %p320 = pneg %p162
        %p321 = pneg %p159
        %p322 = pneg %p188
        %p323 = pneg %p185
        %p324 = scmp.lt.s32.totalorder %s26, 1
        %s325 = scalar_select %p324, %s26, 1
        %s326 = smul.addr %s325, 32
        %s327 = smul.addr %s326, 4
        %s328 = scalar_lea.vmem %s6, %s327
        %p329 = pneg %p214
        %p330 = pneg %p211
        %s331 = sand.u32 %s201, 1
        %s332 = scalar_lea.sflag [#allocation3], %s331
        %s333 = sand.u32 %s201, 1
        %s334 = smul.addr %s333, 4
        %s335 = scalar_lea.vmem [#allocation2], %s334
        %p336 = pneg %p240
        %p337 = pneg %p237
        %s338 = sand.u32 %s227, 1
        %s339 = scalar_lea.sflag [#allocation5], %s338
        %s340 = sand.u32 %s227, 1
        %s341 = smul.addr %s340, 4
        %s342 = scalar_lea.vmem [#allocation4], %s341
        %p343 = scmp.lt.s32.totalorder %s26, 1
        %s344 = scalar_select %p343, %s26, 1
        %s345 = smul.addr %s344, 2
        %s346 = smul.addr %s345, 4
        %s347 = scalar_lea.vmem %s0, %s346
        %p348 = scmp.lt.s32.totalorder %s26, 1
        %s349 = scalar_select %p348, %s26, 1
        %s350 = smul.addr %s349, 8
        %s351 = scalar_lea.vmem %s1, %s350
        %p352 = scmp.lt.s32.totalorder %s26, 1
        %s353 = scalar_select %p352, %s26, 1
        %s354 = smul.addr %s353, 8
        %s355 = scalar_lea.vmem %s2, %s354
        %p356 = scmp.lt.s32.totalorder %s26, 1
        %s357 = scalar_select %p356, %s26, 1
        %s358 = smul.addr %s357, 32
        %s359 = smul.addr %s358, 4
        %s360 = scalar_lea.vmem %s6, %s359
        %v362 = vld [vmem:[%s3] sm:$0x3]
        %v363 = vld [vmem:[%s4] sm:$0x3]
        %v364 = vld [vmem:[%s5] sm:$0x3]
        %v365 = vld [vmem:[%s347] sm:$0xff]
        %v367 = vcombine.high %v365, %v365
        %v369 = vpack.c.bf16 %v365, %v365
        %v370 = vpack.c.bf16 %v367, %v367
        %371 = vxpose.xlu0.c.b16.start [1/8] %v369, 128
        %372 = vxpose.xlu0.c.b16.cont [2/8] 0, 128
        %373 = vxpose.xlu0.c.b16.cont [3/8] 0, 128
        %374 = vxpose.xlu0.c.b16.cont [4/8] 0, 128
        %375 = vxpose.xlu0.c.b16.cont [5/8] 0, 128
        %376 = vxpose.xlu0.c.b16.cont [6/8] 0, 128
        %377 = vxpose.xlu0.c.b16.cont [7/8] 0, 128
        %378 = vxpose.xlu0.c.b16.end [8/8] 0, 128
        %v379 = vpop.trf.xlu0
        %v380 = vpop.trf.xlu0
        %v381 = vpop.trf.xlu0
        %v382 = vpop.trf.xlu0
        %v383 = vpop.trf.xlu0
        %v384 = vpop.trf.xlu0
        %v385 = vpop.trf.xlu0
        %v386 = vpop.trf.xlu0
        %387 = vxpose.xlu0.c.b16.start [1/8] %v370, 128
        %388 = vxpose.xlu0.c.b16.cont [2/8] 0, 128
        %389 = vxpose.xlu0.c.b16.cont [3/8] 0, 128
        %390 = vxpose.xlu0.c.b16.cont [4/8] 0, 128
        %391 = vxpose.xlu0.c.b16.cont [5/8] 0, 128
        %392 = vxpose.xlu0.c.b16.cont [6/8] 0, 128
        %393 = vxpose.xlu0.c.b16.cont [7/8] 0, 128
        %394 = vxpose.xlu0.c.b16.end [8/8] 0, 128
        %v395 = vpop.trf.xlu0
        %v396 = vpop.trf.xlu0
        %v397 = vpop.trf.xlu0
        %v398 = vpop.trf.xlu0
        %v399 = vpop.trf.xlu0
        %v400 = vpop.trf.xlu0
        %v401 = vpop.trf.xlu0
        %v402 = vpop.trf.xlu0
        %vm403 = vcmask 31744
        %v405 = vsel %vm403, %v379, 0
        %v408 = vsel %vm403, %v380, 0
        %v411 = vsel %vm403, %v381, 0
        %v414 = vsel %vm403, %v382, 0
        %v417 = vsel %vm403, %v383, 0
        %v420 = vsel %vm403, %v384, 0
        %v423 = vsel %vm403, %v385, 0
        %v426 = vsel %vm403, %v386, 0
        %v429 = vsel %vm403, %v395, 0
        %v432 = vsel %vm403, %v396, 0
        %v435 = vsel %vm403, %v397, 0
        %v438 = vsel %vm403, %v398, 0
        %v441 = vsel %vm403, %v399, 0
        %v444 = vsel %vm403, %v400, 0
        %v447 = vsel %vm403, %v401, 0
        %v450 = vsel %vm403, %v402, 0
        %vm452 = vcmask 1041408
        %v454 = vsel %vm452, %v362, 0
        %456 = vmatprep.subr.bf16.mxu0 0
        %457 = vmatpush1.bf16.msra.mxu0 %v454
        %458 = vmatprep.subr.bf16.mxu0 0
        %459 = vmatpush1.bf16.msra.mxu0 0
        %460 = vmatprep.subr.bf16.mxu0 0
        %461 = vmatpush1.bf16.msra.mxu0 0
        %462 = vmatprep.subr.bf16.mxu0 0
        %463 = vmatpush1.bf16.msra.mxu0 0
        %464 = vmatprep.subr.bf16.mxu0 0
        %465 = vmatpush1.bf16.msra.mxu0 0
        %466 = vmatprep.subr.bf16.mxu0 0
        %467 = vmatpush1.bf16.msra.mxu0 0
        %468 = vmatprep.subr.bf16.mxu0 0
        %469 = vmatpush1.bf16.msra.mxu0 0
        %470 = vmatprep.subr.bf16.mxu0 0
        %471 = vmatpush1.bf16.msra.mxu0 0
        %472 = vmatprep.subr.bf16.mxu0 0
        %473 = vmatpush1.bf16.msra.mxu0 0
        %474 = vmatprep.subr.bf16.mxu0 0
        %475 = vmatpush1.bf16.msra.mxu0 0
        %476 = vmatprep.subr.bf16.mxu0 0
        %477 = vmatpush1.bf16.msra.mxu0 0
        %478 = vmatprep.subr.bf16.mxu0 0
        %479 = vmatpush1.bf16.msra.mxu0 0
        %480 = vmatprep.subr.bf16.mxu0 0
        %481 = vmatpush1.bf16.msra.mxu0 0
        %482 = vmatprep.subr.bf16.mxu0 0
        %483 = vmatpush1.bf16.msra.mxu0 0
        %484 = vmatprep.subr.bf16.mxu0 0
        %485 = vmatpush1.bf16.msra.mxu0 0
        %486 = vmatprep.subr.bf16.mxu0 0
        %487 = vmatpush1.bf16.msra.mxu0 0
        %488 = vmatprep.mubr.bf16.mxu0 0
        %489 = vmatmul.mubr.bf16.gmra.mrb[0].mxu0 %v405
        %v490 = vpop.f32.mrb[0].mxu0
        %v491 = vadd.f32 0.0, %v490
        %v492 = vpop.f32.mrb[0].mxu0
        %v493 = vpop.f32.mrb[0].mxu0
        %v494 = vadd.f32 0.0, %v493
        %v495 = vpop.f32.mrb[0].mxu0
        %496 = vmatprep.mubr.bf16.mxu0 0
        %497 = vmatmul.mubr.bf16.gmra.mrb[0].mxu0 %v408
        %v498 = vpop.f32.mrb[0].mxu0
        %v499 = vadd.f32 0.0, %v498
        %v500 = vpop.f32.mrb[0].mxu0
        %v501 = vpop.f32.mrb[0].mxu0
        %v502 = vadd.f32 0.0, %v501
        %v503 = vpop.f32.mrb[0].mxu0
        %504 = vmatprep.mubr.bf16.mxu0 0
        %505 = vmatmul.mubr.bf16.gmra.mrb[0].mxu0 %v411
        %v506 = vpop.f32.mrb[0].mxu0
        %v507 = vadd.f32 0.0, %v506
        %v508 = vpop.f32.mrb[0].mxu0
        %v509 = vpop.f32.mrb[0].mxu0
        %v510 = vadd.f32 0.0, %v509
        %v511 = vpop.f32.mrb[0].mxu0
        %512 = vmatprep.mubr.bf16.mxu0 0
        %513 = vmatmul.mubr.bf16.gmra.mrb[0].mxu0 %v414
        %v514 = vpop.f32.mrb[0].mxu0
        %v515 = vadd.f32 0.0, %v514
        %v516 = vpop.f32.mrb[0].mxu0
        %v517 = vpop.f32.mrb[0].mxu0
        %v518 = vadd.f32 0.0, %v517
        %v519 = vpop.f32.mrb[0].mxu0
        %520 = vmatprep.mubr.bf16.mxu0 0
        %521 = vmatmul.mubr.bf16.gmra.mrb[0].mxu0 %v417
        %v522 = vpop.f32.mrb[0].mxu0
        %v523 = vadd.f32 0.0, %v522
        %v524 = vpop.f32.mrb[0].mxu0
        %v525 = vpop.f32.mrb[0].mxu0
        %v526 = vadd.f32 0.0, %v525
        %v527 = vpop.f32.mrb[0].mxu0
        %528 = vmatprep.mubr.bf16.mxu0 0
        %529 = vmatmul.mubr.bf16.gmra.mrb[0].mxu0 %v420
        %v530 = vpop.f32.mrb[0].mxu0
        %v531 = vadd.f32 0.0, %v530
        %v532 = vpop.f32.mrb[0].mxu0
        %v533 = vpop.f32.mrb[0].mxu0
        %v534 = vadd.f32 0.0, %v533
        %v535 = vpop.f32.mrb[0].mxu0
        %536 = vmatprep.mubr.bf16.mxu0 0
        %537 = vmatmul.mubr.bf16.gmra.mrb[0].mxu0 %v423
        %v538 = vpop.f32.mrb[0].mxu0
        %v539 = vadd.f32 0.0, %v538
        %v540 = vpop.f32.mrb[0].mxu0
        %v541 = vpop.f32.mrb[0].mxu0
        %v542 = vadd.f32 0.0, %v541
        %v543 = vpop.f32.mrb[0].mxu0
        %544 = vmatprep.mubr.bf16.mxu0 0
        %545 = vmatmul.mubr.bf16.gmra.mrb[0].mxu0 %v426
        %v546 = vpop.f32.mrb[0].mxu0
        %v547 = vadd.f32 0.0, %v546
        %v548 = vpop.f32.mrb[0].mxu0
        %v549 = vpop.f32.mrb[0].mxu0
        %v550 = vadd.f32 0.0, %v549
        %v551 = vpop.f32.mrb[0].mxu0
        %552 = vmatprep.mubr.bf16.mxu0 0
        %553 = vmatmul.mubr.bf16.gmra.mrb[0].mxu0 %v429
        %v554 = vpop.f32.mrb[0].mxu0
        %v555 = vadd.f32 0.0, %v554
        %v556 = vpop.f32.mrb[0].mxu0
        %v557 = vpop.f32.mrb[0].mxu0
        %v558 = vadd.f32 0.0, %v557
        %v559 = vpop.f32.mrb[0].mxu0
        %560 = vmatprep.mubr.bf16.mxu0 0
        %561 = vmatmul.mubr.bf16.gmra.mrb[0].mxu0 %v432
        %v562 = vpop.f32.mrb[0].mxu0
        %v563 = vadd.f32 0.0, %v562
        %v564 = vpop.f32.mrb[0].mxu0
        %v565 = vpop.f32.mrb[0].mxu0
        %v566 = vadd.f32 0.0, %v565
        %v567 = vpop.f32.mrb[0].mxu0
        %568 = vmatprep.mubr.bf16.mxu0 0
        %569 = vmatmul.mubr.bf16.gmra.mrb[0].mxu0 %v435
        %v570 = vpop.f32.mrb[0].mxu0
        %v571 = vadd.f32 0.0, %v570
        %v572 = vpop.f32.mrb[0].mxu0
        %v573 = vpop.f32.mrb[0].mxu0
        %v574 = vadd.f32 0.0, %v573
        %v575 = vpop.f32.mrb[0].mxu0
        %576 = vmatprep.mubr.bf16.mxu0 0
        %577 = vmatmul.mubr.bf16.gmra.mrb[0].mxu0 %v438
        %v578 = vpop.f32.mrb[0].mxu0
        %v579 = vadd.f32 0.0, %v578
        %v580 = vpop.f32.mrb[0].mxu0
        %v581 = vpop.f32.mrb[0].mxu0
        %v582 = vadd.f32 0.0, %v581
        %v583 = vpop.f32.mrb[0].mxu0
        %584 = vmatprep.mubr.bf16.mxu0 0
        %585 = vmatmul.mubr.bf16.gmra.mrb[0].mxu0 %v441
        %v586 = vpop.f32.mrb[0].mxu0
        %v587 = vadd.f32 0.0, %v586
        %v588 = vpop.f32.mrb[0].mxu0
        %v589 = vpop.f32.mrb[0].mxu0
        %v590 = vadd.f32 0.0, %v589
        %v591 = vpop.f32.mrb[0].mxu0
        %592 = vmatprep.mubr.bf16.mxu0 0
        %593 = vmatmul.mubr.bf16.gmra.mrb[0].mxu0 %v444
        %v594 = vpop.f32.mrb[0].mxu0
        %v595 = vadd.f32 0.0, %v594
        %v596 = vpop.f32.mrb[0].mxu0
        %v597 = vpop.f32.mrb[0].mxu0
        %v598 = vadd.f32 0.0, %v597
        %v599 = vpop.f32.mrb[0].mxu0
        %600 = vmatprep.mubr.bf16.mxu0 0
        %601 = vmatmul.mubr.bf16.gmra.mrb[0].mxu0 %v447
        %v602 = vpop.f32.mrb[0].mxu0
        %v603 = vadd.f32 0.0, %v602
        %v604 = vpop.f32.mrb[0].mxu0
        %v605 = vpop.f32.mrb[0].mxu0
        %v606 = vadd.f32 0.0, %v605
        %v607 = vpop.f32.mrb[0].mxu0
        %608 = vmatprep.mubr.bf16.mxu0 0
        %609 = vmatmul.mubr.bf16.gmra.mrb[0].mxu0 %v450
        %v610 = vpop.f32.mrb[0].mxu0
        %v611 = vadd.f32 0.0, %v610
        %v612 = vpop.f32.mrb[0].mxu0
        %v613 = vpop.f32.mrb[0].mxu0
        %v614 = vadd.f32 0.0, %v613
        %v615 = vpop.f32.mrb[0].mxu0
        %616 = vdwg.mxu0
        %v617 = vpack.c.bf16 %v494, %v491
        %v618 = vpack.c.bf16 %v502, %v499
        %v619 = vpack.c.bf16 %v510, %v507
        %v620 = vpack.c.bf16 %v518, %v515
        %v621 = vpack.c.bf16 %v526, %v523
        %v622 = vpack.c.bf16 %v534, %v531
        %v623 = vpack.c.bf16 %v542, %v539
        %v624 = vpack.c.bf16 %v550, %v547
        %v625 = vpack.c.bf16 %v558, %v555
        %v626 = vpack.c.bf16 %v566, %v563
        %v627 = vpack.c.bf16 %v574, %v571
        %v628 = vpack.c.bf16 %v582, %v579
        %v629 = vpack.c.bf16 %v590, %v587
        %v630 = vpack.c.bf16 %v598, %v595
        %v631 = vpack.c.bf16 %v606, %v603
        %v632 = vpack.c.bf16 %v614, %v611
        %v649 = vunpack.c.l.b16 %v617
        %v650 = vunpack.c.h.b16 %v617
        %v651 = vunpack.c.l.b16 %v618
        %v652 = vunpack.c.h.b16 %v618
        %v653 = vunpack.c.l.b16 %v619
        %v654 = vunpack.c.h.b16 %v619
        %v655 = vunpack.c.l.b16 %v620
        %v656 = vunpack.c.h.b16 %v620
        %v657 = vunpack.c.l.b16 %v621
        %v658 = vunpack.c.h.b16 %v621
        %v659 = vunpack.c.l.b16 %v622
        %v660 = vunpack.c.h.b16 %v622
        %v661 = vunpack.c.l.b16 %v623
        %v662 = vunpack.c.h.b16 %v623
        %v663 = vunpack.c.l.b16 %v624
        %v664 = vunpack.c.h.b16 %v624
        %v665 = vunpack.c.l.b16 %v625
        %v666 = vunpack.c.h.b16 %v625
        %v667 = vunpack.c.l.b16 %v626
        %v668 = vunpack.c.h.b16 %v626
        %v669 = vunpack.c.l.b16 %v627
        %v670 = vunpack.c.h.b16 %v627
        %v671 = vunpack.c.l.b16 %v628
        %v672 = vunpack.c.h.b16 %v628
        %v673 = vunpack.c.l.b16 %v629
        %v674 = vunpack.c.h.b16 %v629
        %v675 = vunpack.c.l.b16 %v630
        %v676 = vunpack.c.h.b16 %v630
        %v677 = vunpack.c.l.b16 %v631
        %v678 = vunpack.c.h.b16 %v631
        %v679 = vunpack.c.l.b16 %v632
        %v680 = vunpack.c.h.b16 %v632
        %v681 = vpack.c.b16 %v649, %v649
        %v682 = vpack.c.b16 %v650, %v650
        %v683 = vpack.c.b16 %v651, %v651
        %v684 = vpack.c.b16 %v652, %v652
        %v685 = vpack.c.b16 %v653, %v653
        %v686 = vpack.c.b16 %v654, %v654
        %v687 = vpack.c.b16 %v655, %v655
        %v688 = vpack.c.b16 %v656, %v656
        %v689 = vpack.c.b16 %v657, %v657
        %v690 = vpack.c.b16 %v658, %v658
        %v691 = vpack.c.b16 %v659, %v659
        %v692 = vpack.c.b16 %v660, %v660
        %v693 = vpack.c.b16 %v661, %v661
        %v694 = vpack.c.b16 %v662, %v662
        %v695 = vpack.c.b16 %v663, %v663
        %v696 = vpack.c.b16 %v664, %v664
        %v697 = vpack.c.b16 %v665, %v665
        %v698 = vpack.c.b16 %v666, %v666
        %v699 = vpack.c.b16 %v667, %v667
        %v700 = vpack.c.b16 %v668, %v668
        %v701 = vpack.c.b16 %v669, %v669
        %v702 = vpack.c.b16 %v670, %v670
        %v703 = vpack.c.b16 %v671, %v671
        %v704 = vpack.c.b16 %v672, %v672
        %v705 = vpack.c.b16 %v673, %v673
        %v706 = vpack.c.b16 %v674, %v674
        %v707 = vpack.c.b16 %v675, %v675
        %v708 = vpack.c.b16 %v676, %v676
        %v709 = vpack.c.b16 %v677, %v677
        %v710 = vpack.c.b16 %v678, %v678
        %v711 = vpack.c.b16 %v679, %v679
        %v712 = vpack.c.b16 %v680, %v680
        %vm745 = vcmask 257024
        %746 = vst.msk [vmem:[%s360] sm:$0xf] %vm745, %v681
        %747 = vst.msk [vmem:[%s360 + $0x4] sm:$0xf] %vm745, %v682
        %748 = vst.msk [vmem:[%s360 + $0x8] sm:$0xf] %vm745, %v683
        %749 = vst.msk [vmem:[%s360 + $0xc] sm:$0xf] %vm745, %v684
        %750 = vst.msk [vmem:[%s360 + $0x10] sm:$0xf] %vm745, %v685
        %751 = vst.msk [vmem:[%s360 + $0x14] sm:$0xf] %vm745, %v686
        %752 = vst.msk [vmem:[%s360 + $0x18] sm:$0xf] %vm745, %v687
        %753 = vst.msk [vmem:[%s360 + $0x1c] sm:$0xf] %vm745, %v688
        %754 = vst.msk [vmem:[%s360 + $0x20] sm:$0xf] %vm745, %v689
        %755 = vst.msk [vmem:[%s360 + $0x24] sm:$0xf] %vm745, %v690
        %756 = vst.msk [vmem:[%s360 + $0x28] sm:$0xf] %vm745, %v691
        %757 = vst.msk [vmem:[%s360 + $0x2c] sm:$0xf] %vm745, %v692
        %758 = vst.msk [vmem:[%s360 + $0x30] sm:$0xf] %vm745, %v693
        %759 = vst.msk [vmem:[%s360 + $0x34] sm:$0xf] %vm745, %v694
        %760 = vst.msk [vmem:[%s360 + $0x38] sm:$0xf] %vm745, %v695
        %761 = vst.msk [vmem:[%s360 + $0x3c] sm:$0xf] %vm745, %v696
        %762 = vst.msk [vmem:[%s360 + $0x40] sm:$0xf] %vm745, %v697
        %763 = vst.msk [vmem:[%s360 + $0x44] sm:$0xf] %vm745, %v698
        %764 = vst.msk [vmem:[%s360 + $0x48] sm:$0xf] %vm745, %v699
        %765 = vst.msk [vmem:[%s360 + $0x4c] sm:$0xf] %vm745, %v700
        %766 = vst.msk [vmem:[%s360 + $0x50] sm:$0xf] %vm745, %v701
        %767 = vst.msk [vmem:[%s360 + $0x54] sm:$0xf] %vm745, %v702
        %768 = vst.msk [vmem:[%s360 + $0x58] sm:$0xf] %vm745, %v703
        %769 = vst.msk [vmem:[%s360 + $0x5c] sm:$0xf] %vm745, %v704
        %770 = vst.msk [vmem:[%s360 + $0x60] sm:$0xf] %vm745, %v705
        %771 = vst.msk [vmem:[%s360 + $0x64] sm:$0xf] %vm745, %v706
        %772 = vst.msk [vmem:[%s360 + $0x68] sm:$0xf] %vm745, %v707
        %773 = vst.msk [vmem:[%s360 + $0x6c] sm:$0xf] %vm745, %v708
        %774 = vst.msk [vmem:[%s360 + $0x70] sm:$0xf] %vm745, %v709
        %775 = vst.msk [vmem:[%s360 + $0x74] sm:$0xf] %vm745, %v710
        %776 = vst.msk [vmem:[%s360 + $0x78] sm:$0xf] %vm745, %v711
        %777 = vst.msk [vmem:[%s360 + $0x7c] sm:$0xf] %vm745, %v712
        %v778 = vld [vmem:[%s351] sm:$0xff]
        %v779 = vpack.c.bf16 %v778, %v778
        %v781 = vsel %vm403, %v779, 0
        %v784 = vsel %vm452, %v363, 0
        %786 = vmatprep.subr.bf16.mxu0 0
        %787 = vmatpush1.bf16.msra.mxu0 %v784
        %788 = vmatprep.subr.bf16.mxu0 0
        %789 = vmatpush1.bf16.msra.mxu0 0
        %790 = vmatprep.subr.bf16.mxu0 0
        %791 = vmatpush1.bf16.msra.mxu0 0
        %792 = vmatprep.subr.bf16.mxu0 0
        %793 = vmatpush1.bf16.msra.mxu0 0
        %794 = vmatprep.subr.bf16.mxu0 0
        %795 = vmatpush1.bf16.msra.mxu0 0
        %796 = vmatprep.subr.bf16.mxu0 0
        %797 = vmatpush1.bf16.msra.mxu0 0
        %798 = vmatprep.subr.bf16.mxu0 0
        %799 = vmatpush1.bf16.msra.mxu0 0
        %800 = vmatprep.subr.bf16.mxu0 0
        %801 = vmatpush1.bf16.msra.mxu0 0
        %802 = vmatprep.subr.bf16.mxu0 0
        %803 = vmatpush1.bf16.msra.mxu0 0
        %804 = vmatprep.subr.bf16.mxu0 0
        %805 = vmatpush1.bf16.msra.mxu0 0
        %806 = vmatprep.subr.bf16.mxu0 0
        %807 = vmatpush1.bf16.msra.mxu0 0
        %808 = vmatprep.subr.bf16.mxu0 0
        %809 = vmatpush1.bf16.msra.mxu0 0
        %810 = vmatprep.subr.bf16.mxu0 0
        %811 = vmatpush1.bf16.msra.mxu0 0
        %812 = vmatprep.subr.bf16.mxu0 0
        %813 = vmatpush1.bf16.msra.mxu0 0
        %814 = vmatprep.subr.bf16.mxu0 0
        %815 = vmatpush1.bf16.msra.mxu0 0
        %816 = vmatprep.subr.bf16.mxu0 0
        %817 = vmatpush1.bf16.msra.mxu0 0
        %818 = vmatprep.mubr.bf16.mxu0 0
        %819 = vmatmul.mubr.bf16.gmra.mrb[0].mxu0 %v781
        %v820 = vpop.f32.mrb[0].mxu0
        %v821 = vadd.f32 0.0, %v820
        %v822 = vpop.f32.mrb[0].mxu0
        %v823 = vpop.f32.mrb[0].mxu0
        %v824 = vpop.f32.mrb[0].mxu0
        %825 = vdwg.mxu0
        %v826 = vpack.c.bf16 %v821, %v821
        %827 = vst.msk [vmem:[%s335] sm:$0xf] %vm745, %v826
        %v828 = vld [vmem:[%s355] sm:$0xff]
        %v829 = vpack.c.bf16 %v828, %v828
        %v831 = vsel %vm403, %v829, 0
        %v834 = vsel %vm452, %v364, 0
        %836 = vmatprep.subr.bf16.mxu0 0
        %837 = vmatpush1.bf16.msra.mxu0 %v834
        %838 = vmatprep.subr.bf16.mxu0 0
        %839 = vmatpush1.bf16.msra.mxu0 0
        %840 = vmatprep.subr.bf16.mxu0 0
        %841 = vmatpush1.bf16.msra.mxu0 0
        %842 = vmatprep.subr.bf16.mxu0 0
        %843 = vmatpush1.bf16.msra.mxu0 0
        %844 = vmatprep.subr.bf16.mxu0 0
        %845 = vmatpush1.bf16.msra.mxu0 0
        %846 = vmatprep.subr.bf16.mxu0 0
        %847 = vmatpush1.bf16.msra.mxu0 0
        %848 = vmatprep.subr.bf16.mxu0 0
        %849 = vmatpush1.bf16.msra.mxu0 0
        %850 = vmatprep.subr.bf16.mxu0 0
        %851 = vmatpush1.bf16.msra.mxu0 0
        %852 = vmatprep.subr.bf16.mxu0 0
        %853 = vmatpush1.bf16.msra.mxu0 0
        %854 = vmatprep.subr.bf16.mxu0 0
        %855 = vmatpush1.bf16.msra.mxu0 0
        %856 = vmatprep.subr.bf16.mxu0 0
        %857 = vmatpush1.bf16.msra.mxu0 0
        %858 = vmatprep.subr.bf16.mxu0 0
        %859 = vmatpush1.bf16.msra.mxu0 0
        %860 = vmatprep.subr.bf16.mxu0 0
        %861 = vmatpush1.bf16.msra.mxu0 0
        %862 = vmatprep.subr.bf16.mxu0 0
        %863 = vmatpush1.bf16.msra.mxu0 0
        %864 = vmatprep.subr.bf16.mxu0 0
        %865 = vmatpush1.bf16.msra.mxu0 0
        %866 = vmatprep.subr.bf16.mxu0 0
        %867 = vmatpush1.bf16.msra.mxu0 0
        %868 = vmatprep.mubr.bf16.mxu0 0
        %869 = vmatmul.mubr.bf16.gmra.mrb[0].mxu0 %v831
        %v870 = vpop.f32.mrb[0].mxu0
        %v871 = vadd.f32 0.0, %v870
        %v872 = vpop.f32.mrb[0].mxu0
        %v873 = vpop.f32.mrb[0].mxu0
        %v874 = vpop.f32.mrb[0].mxu0
        %875 = vdwg.mxu0
        %v876 = vpack.c.bf16 %v871, %v871
        %877 = vst.msk [vmem:[%s342] sm:$0xf] %vm745, %v876
        %p878 = scmp.lt.s32.totalorder %s26, 1
        %s879 = scalar_select %p878, %s26, 1
        %s880 = smul.addr %s879, 32
        %s881 = smul.addr %s880, 4
        %s882 = scalar_lea.vmem %s6, %s881
        %s883 = sand.u32 %s201, 1
        %s884 = scalar_lea.sflag [#allocation3], %s883
        %s885 = sand.u32 %s201, 1
        %s886 = smul.addr %s885, 4
        %s887 = scalar_lea.vmem [#allocation2], %s886
        %s888 = sand.u32 %s227, 1
        %s889 = scalar_lea.sflag [#allocation5], %s888
        %s890 = sand.u32 %s227, 1
        %s891 = smul.addr %s890, 4
        %s892 = scalar_lea.vmem [#allocation4], %s891
        // Predicated region
        $region45: #{tpu_custom_call.1} parent=43 // pred_check
          %p893 = pneg %p185
        $region46: #{tpu_custom_call.1} parent=43 // pred_check_branch
          %895 = sbr.rel (%p893) target = $region48
        $region47: #{tpu_custom_call.1} parent=43 // pred_region
          _
        $region48: #{tpu_custom_call.1} parent=43 // pred_fallthru
          _
        // Predicated region
        $region49: #{tpu_custom_call.1} parent=43 // pred_check
          %p896 = pneg %p211
        $region50: #{tpu_custom_call.1} parent=43 // pred_check_branch
          %898 = sbr.rel (%p896) target = $region52
        $region51: #{tpu_custom_call.1} parent=43 // pred_region
          %s900 = ssub.s32 64, 64
          %901 = vsyncadd %s884, %s900
          %s902 = smul.addr %s26, 64
          %s903 = scalar_lea.hbm %s7, %s902
          %s905 = sshll.u32 %s887, 4
          %s906 = int_to_ptr.vmem [resolvable:$true] %s905
          %908 = dma.vmem_to_hbm [thread:$0]  %s906, 64, %s903, %s884
        $region52: #{tpu_custom_call.1} parent=43 // pred_fallthru
          _
        // Predicated region
        $region53: #{tpu_custom_call.1} parent=43 // pred_check
          %p909 = pneg %p237
        $region54: #{tpu_custom_call.1} parent=43 // pred_check_branch
          %911 = sbr.rel (%p909) target = $region56
        $region55: #{tpu_custom_call.1} parent=43 // pred_region
          %s913 = ssub.s32 64, 64
          %914 = vsyncadd %s889, %s913
          %s915 = smul.addr %s26, 64
          %s916 = scalar_lea.hbm %s8, %s915
          %s918 = sshll.u32 %s892, 4
          %s919 = int_to_ptr.vmem [resolvable:$true] %s918
          %921 = dma.vmem_to_hbm [thread:$0]  %s919, 64, %s916, %s889
        $region56: #{tpu_custom_call.1} parent=43 // pred_fallthru
          _
      $region44: #{tpu_custom_call.1} parent=5 // pred_fallthru
        _
      %p922 = scmp.le.s32.totalorder 2, %s21
      // Predicated region
      $region57: #{tpu_custom_call.1} parent=5 // pred_check
        %p923 = pneg %p922
      $region58: #{tpu_custom_call.1} parent=5 // pred_check_branch
        %925 = sbr.rel (%p923) target = $region60
      $region59: #{tpu_custom_call.1} parent=5 // pred_region
        %s926 = ssub.s32 %s21, 2
        // Predicated region
        $region61: #{tpu_custom_call.1} parent=59 // pred_check
          %p927 = pneg %p191
        $region62: #{tpu_custom_call.1} parent=59 // pred_check_branch
          %929 = sbr.rel (%p927) target = $region64
        $region63: #{tpu_custom_call.1} parent=59 // pred_region
          %p930 = scmp.lt.s32.totalorder %s27, 1
          %s931 = scalar_select %p930, %s27, 1
          %s932 = smul.addr %s931, 32
          %s933 = smul.addr %s932, 4
          %s934 = scalar_lea.vmem %s6, %s933
        $region64: #{tpu_custom_call.1} parent=59 // pred_fallthru
          _
        // Predicated region
        $region65: #{tpu_custom_call.1} parent=59 // pred_check
          %p935 = pneg %p217
        $region66: #{tpu_custom_call.1} parent=59 // pred_check_branch
          %937 = sbr.rel (%p935) target = $region68
        $region67: #{tpu_custom_call.1} parent=59 // pred_region
          %s938 = sand.u32 %s202, 1
          %s939 = scalar_lea.sflag [#allocation3], %s938
          %s940 = sand.u32 %s202, 1
          %s941 = smul.addr %s940, 4
          %s942 = scalar_lea.vmem [#allocation2], %s941
          %943 = dma.done %s939, 64
        $region68: #{tpu_custom_call.1} parent=59 // pred_fallthru
          _
        // Predicated region
        $region69: #{tpu_custom_call.1} parent=59 // pred_check
          %p944 = pneg %p243
        $region70: #{tpu_custom_call.1} parent=59 // pred_check_branch
          %946 = sbr.rel (%p944) target = $region72
        $region71: #{tpu_custom_call.1} parent=59 // pred_region
          %s947 = sand.u32 %s228, 1
          %s948 = scalar_lea.sflag [#allocation5], %s947
          %s949 = sand.u32 %s228, 1
          %s950 = smul.addr %s949, 4
          %s951 = scalar_lea.vmem [#allocation4], %s950
          %952 = dma.done %s948, 64
        $region72: #{tpu_custom_call.1} parent=59 // pred_fallthru
          _
      $region60: #{tpu_custom_call.1} parent=5 // pred_fallthru
        _
    $region6: #{tpu_custom_call.1} parent=1 // loop_footer
      %s25 = sadd.s32 1, %s21
    $region7: #{tpu_custom_call.1} parent=1 // loop_footer_branch
      %20 = sbr.rel target = $region3
    $region8: #{tpu_custom_call.1} parent=1 // loop_exit
      _
    %953 = vsyncpa [#allocation3], 1
    %s954 = scalar_lea.sflag [#allocation3], 1
    %955 = vsyncpa %s954, 1
    %956 = vsyncpa [#allocation5], 1
    %s957 = scalar_lea.sflag [#allocation5], 1
    %958 = vsyncpa %s957, 1

</llo_original>
